<compile_context>
chip_gen: v7x
topology: tpu7x:2x2x1
jax: 0.10.0
libtpu: 0.0.40
codegen_flags: <defaults>
</compile_context>

<pallas_src>
import jax
import jax.numpy as jnp
from jax import lax
from jax.experimental import pallas as pl
from jax.experimental.pallas import tpu as pltpu


HIDDEN_DIM = 512    # fixed by the PyTorch module
OUT_ROWS = 8        # sublane-padded output rows; row 0 holds the real logit


def _mlp_kernel(x_ref, w1_ref, b1_ref, w2_ref, b2_ref, o_ref):
    # In-kernel cast f32 -> bf16 (VPU slot, essentially free; keeps x HBM
    # traffic at 4 B/elem instead of 4+2+2 with a wrapper-side cast pass).
    x = x_ref[...].astype(jnp.bfloat16)                          # (tb, F)
    # ---- Linear(F -> 512): bf16 operands on the MXU, f32 accumulation ----
    h = jnp.dot(x, w1_ref[...], preferred_element_type=jnp.float32)
    h = jnp.maximum(h + b1_ref[...], 0.0).astype(jnp.bfloat16)   # (tb, H)
    # ---- Linear(512 -> 1), computed transposed for a lean output path ----
    # w2_ref: (OUT_ROWS, H) with only row 0 non-zero.  Contract on H:
    # (OUT_ROWS, H) x (tb, H) -> (OUT_ROWS, tb); row 0 = logits.
    out = lax.dot_general(w2_ref[...], h,
                          dimension_numbers=(((1,), (1,)), ((), ())),
                          preferred_element_type=jnp.float32)
    o_ref[...] = out + b2_ref[0, 0]


def prepare_classifier_params(w1, b1, w2, b2, mxu_dtype=jnp.bfloat16):
    """One-time weight prep (hoisted out of the per-call hot path).

    w1: (H, F), b1: (H,), w2: (1, H), b2: (1,)  -- PyTorch Linear layouts.
    """
    H, F = w1.shape
    assert H == HIDDEN_DIM and w2.shape == (1, H)
    w1_t = w1.T.astype(mxu_dtype)                                  # (F, H)
    b1_r = b1.reshape(1, H).astype(jnp.float32)                    # (1, H)
    w2_p = jnp.zeros((OUT_ROWS, H), mxu_dtype).at[0, :].set(
        w2[0].astype(mxu_dtype))                                   # (8, H)
    b2_r = b2.reshape(1, 1).astype(jnp.float32)                    # (1, 1)
    return w1_t, b1_r, w2_p, b2_r


def classifier_forward(x, w1_t, b1_r, w2_p, b2_r, *, tile_b=512):
    """Forward pass of the `classifier` module.

    x: (B, F) float32.  Params come from prepare_classifier_params().
    Returns (B, 1) float32.
    tile_b: batch tile; keep a multiple of 256 (512-1024 recommended).
            Clamped to B for small batches.
    """
    B, F = x.shape
    F2, H = w1_t.shape
    assert F2 == F and H == HIDDEN_DIM
    assert tile_b % 128 == 0, "tile_b must be a multiple of 128 (use 256/512/1024)"

    # Tile selection: if the whole batch fits in one tile, use the exact batch
    # size (block dims equal to full array dims always satisfy layout rules);
    # otherwise keep the lane/sublane-aligned tile and let Pallas mask the
    # ragged last block (rows are independent; junk rows are never read back).
    tb = B if B <= tile_b else tile_b
    grid = (pl.cdiv(B, tb),)

    out = pl.pallas_call(
        _mlp_kernel,
        out_shape=jax.ShapeDtypeStruct((OUT_ROWS, B), jnp.float32),
        grid=grid,
        in_specs=[
            pl.BlockSpec((tb, F), lambda i: (i, 0)),               # x tile (f32)
            pl.BlockSpec((F, H), lambda i: (0, 0)),                # W1^T resident
            pl.BlockSpec((1, H), lambda i: (0, 0)),                # b1 resident
            pl.BlockSpec((OUT_ROWS, H), lambda i: (0, 0)),         # W2 padded
            pl.BlockSpec(memory_space=pltpu.MemorySpace.SMEM),     # b2 scalar
        ],
        out_specs=pl.BlockSpec((OUT_ROWS, tb), lambda i: (0, i)),  # (8, B) slab
        compiler_params=pltpu.CompilerParams(
            dimension_semantics=("parallel",)),   # shards batch grid over TCs (v7x)
    )(x, w1_t, b1_r, w2_p, b2_r)

    # Row 0 holds the real logits; rows 1..7 are zero-weight filler.
    return out[0, :B].reshape(B, 1)


def reference_forward(x, w1, b1, w2, b2, mxu_dtype=jnp.bfloat16):
    """Pure-JAX reference with the same bf16-operand / f32-accumulate recipe."""
    h = jnp.dot(x.astype(mxu_dtype), w1.T.astype(mxu_dtype),
                preferred_element_type=jnp.float32) + b1.reshape(1, -1)
    h = jnp.maximum(h, 0.0)
    out = jnp.dot(h.astype(mxu_dtype), w2.T.astype(mxu_dtype),
                  preferred_element_type=jnp.float32) + b2.reshape(1, 1)
    return out


if __name__ == "__main__":
    key = jax.random.PRNGKey(0)
    B, F, H = 16, 256, HIDDEN_DIM   # feature_dim=256, hidden_dim=512 (module)

    k_x, k_w1, k_b1, k_w2, k_b2 = jax.random.split(key, 5)
    x = jax.random.normal(k_x, (B, F), dtype=jnp.float32)

    # PyTorch Linear-shaped synthetic parameters.
    w1 = jax.random.normal(k_w1, (H, F), dtype=jnp.float32) * 0.02
    b1 = jax.random.normal(k_b1, (H,), dtype=jnp.float32) * 0.01
    w2 = jax.random.normal(k_w2, (1, H), dtype=jnp.float32) * 0.02
    b2 = jax.random.normal(k_b2, (1,), dtype=jnp.float32) * 0.01

    params = prepare_classifier_params(w1, b1, w2, b2)
    y = classifier_forward(x, *params, tile_b=512)
    y = jax.block_until_ready(y)

    y_ref = reference_forward(x, w1, b1, w2, b2)
    assert y.shape == (B, 1)
    assert jnp.allclose(y, y_ref, atol=1e-3, rtol=1e-3), "mismatch vs reference"

    print("KERNEL_OK")
</pallas_src>

<mosaic_0001>
module attributes {stable_mosaic.version = 11 : i64} {
  func.func @_mlp_kernel(%arg0: i32, %arg1: memref<16x256xf32, #tpu.memory_space<vmem>>, %arg2: memref<256x512xbf16, #tpu.memory_space<vmem>>, %arg3: memref<1x512xf32, #tpu.memory_space<vmem>>, %arg4: memref<8x512xbf16, #tpu.memory_space<vmem>>, %arg5: memref<1x1xf32, #tpu.memory_space<smem>>, %arg6: memref<8x16xf32, #tpu.memory_space<vmem>>) attributes {dimension_semantics = [#tpu.dimension_semantics<parallel>], iteration_bounds = array<i64: 1>, scalar_prefetch = 0 : i64, scratch_operands = 0 : i64, tpu.core_type = #tpu.core_type<tc>, window_params = [{transform_indices = @transform_0, window_bounds = array<i64: 16, 256>}, {pipeline_mode = #tpu.pipeline_mode<synchronous>, transform_indices = @transform_1, window_bounds = array<i64: 256, 512>}, {pipeline_mode = #tpu.pipeline_mode<synchronous>, transform_indices = @transform_2, window_bounds = array<i64: 1, 512>}, {pipeline_mode = #tpu.pipeline_mode<synchronous>, transform_indices = @transform_3, window_bounds = array<i64: 8, 512>}, {transform_indices = @transform_4, window_bounds = array<i64: 1, 1>}, {transform_indices = @transform_5, window_bounds = array<i64: 8, 16>}]} {
    %c0 = arith.constant 0 : index
    %c0_0 = arith.constant 0 : index
    %0 = vector.load %arg1[%c0, %c0_0] : memref<16x256xf32, #tpu.memory_space<vmem>>, vector<16x256xf32>
    %1 = arith.truncf %0 : vector<16x256xf32> to vector<16x256xbf16>
    %c0_1 = arith.constant 0 : index
    %c0_2 = arith.constant 0 : index
    %2 = vector.load %arg2[%c0_1, %c0_2] : memref<256x512xbf16, #tpu.memory_space<vmem>>, vector<256x512xbf16>
    %cst = arith.constant dense<0.000000e+00> : vector<16x512xf32>
    %3 = tpu.matmul %1, %2, %cst {dimension_numbers = #tpu.dot_dimension_numbers<[1], [0], [0], [1], [0, 0, 1, 1], [], []>} : vector<16x256xbf16>, vector<256x512xbf16>, vector<16x512xf32> -> vector<16x512xf32>
    %c0_3 = arith.constant 0 : index
    %c0_4 = arith.constant 0 : index
    %4 = vector.load %arg3[%c0_3, %c0_4] : memref<1x512xf32, #tpu.memory_space<vmem>>, vector<1x512xf32>
    %5 = vector.broadcast %4 : vector<1x512xf32> to vector<16x512xf32>
    %6 = arith.addf %3, %5 : vector<16x512xf32>
    %cst_5 = arith.constant 0.000000e+00 : f32
    %7 = vector.broadcast %cst_5 : f32 to vector<16x512xf32>
    %8 = arith.maximumf %6, %7 : vector<16x512xf32>
    %9 = arith.truncf %8 : vector<16x512xf32> to vector<16x512xbf16>
    %c0_6 = arith.constant 0 : index
    %c0_7 = arith.constant 0 : index
    %10 = vector.load %arg4[%c0_6, %c0_7] : memref<8x512xbf16, #tpu.memory_space<vmem>>, vector<8x512xbf16>
    %cst_8 = arith.constant dense<0.000000e+00> : vector<8x16xf32>
    %11 = tpu.matmul %10, %9, %cst_8 {dimension_numbers = #tpu.dot_dimension_numbers<[1], [1], [0], [0], [0, 0, 1, 0], [], []>} : vector<8x512xbf16>, vector<16x512xbf16>, vector<8x16xf32> -> vector<8x16xf32>
    %c0_9 = arith.constant 0 : index
    %c0_10 = arith.constant 0 : index
    %12 = memref.load %arg5[%c0_9, %c0_10] : memref<1x1xf32, #tpu.memory_space<smem>>
    %13 = vector.broadcast %12 : f32 to vector<8x16xf32>
    %14 = arith.addf %11, %13 : vector<8x16xf32>
    %c0_11 = arith.constant 0 : index
    %c0_12 = arith.constant 0 : index
    %15 = vector.load %arg6[%c0_11, %c0_12] : memref<8x16xf32, #tpu.memory_space<vmem>>, vector<8x16xf32>
    tpu.vector_store %arg6[%c0_11, %c0_12], %14 {strides = array<i32>} : memref<8x16xf32, #tpu.memory_space<vmem>>, vector<8x16xf32>,
    return
  }
  func.func @transform_0(%arg0: i32) -> (i32, i32) {
    %c0_i32 = arith.constant 0 : i32
    %c0_i32_0 = arith.constant 0 : i32
    return %arg0, %c0_i32 : i32, i32
  }
  func.func @transform_1(%arg0: i32) -> (i32, i32) {
    %c0_i32 = arith.constant 0 : i32
    %c0_i32_0 = arith.constant 0 : i32
    %c0_i32_1 = arith.constant 0 : i32
    return %c0_i32, %c0_i32_0 : i32, i32
  }
  func.func @transform_2(%arg0: i32) -> (i32, i32) {
    %c0_i32 = arith.constant 0 : i32
    %c0_i32_0 = arith.constant 0 : i32
    %c0_i32_1 = arith.constant 0 : i32
    return %c0_i32, %c0_i32_0 : i32, i32
  }
  func.func @transform_3(%arg0: i32) -> (i32, i32) {
    %c0_i32 = arith.constant 0 : i32
    %c0_i32_0 = arith.constant 0 : i32
    %c0_i32_1 = arith.constant 0 : i32
    return %c0_i32, %c0_i32_0 : i32, i32
  }
  func.func @transform_4(%arg0: i32) -> (i32, i32) {
    %c0_i32 = arith.constant 0 : i32
    %c0_i32_0 = arith.constant 0 : i32
    %c0_i32_1 = arith.constant 0 : i32
    return %c0_i32, %c0_i32_0 : i32, i32
  }
  func.func @transform_5(%arg0: i32) -> (i32, i32) {
    %c0_i32 = arith.constant 0 : i32
    %c0_i32_0 = arith.constant 0 : i32
    return %c0_i32, %arg0 : i32, i32
  }
}

</mosaic_0001>

<llo_original>
// kernel: tpu_custom_call.1
$region0: #{tpu_custom_call.1}
  #allocation0 [shape = 'u32[]', space=smem, size = 0x4, offset = 0x4, fixed_abs, tag = 'smem constant byte address 0x4 - core index']
  #allocation1 [shape = 'u32[144,128]{1,0:T(1,128)}', space=vmem, size = 0x12000, scoped, tag = 'internal scratch']
  #allocation2 [shape = 'f32[1,1]{1,0:T(1,128)S(6)}', space=smem, size = 0x200, scoped, tag = 'scoped memory for tpu_custom_call.1']
  %s0 = inlined_call_operand.hbm [shape: f32[16,256], index: 0, kind: input, shape index: {}]
  %s1 = inlined_call_operand.hbm [shape: bf16[256,512], index: 1, kind: input, shape index: {}]
  %s2 = inlined_call_operand.vmem [shape: f32[1,512], index: 2, kind: input, shape index: {}]
  %s3 = inlined_call_operand.hbm [shape: bf16[8,512], index: 3, kind: input, shape index: {}]
  %s4 = inlined_call_operand.<no memory space> [shape: f32[1,1], index: 4, kind: input, shape index: {}]
  %s5 = inlined_call_operand.hbm [shape: f32[8,16], index: 5, kind: output, shape index: {}]
  %s6 = sld [smem:[#allocation0]]
  $region42: #{tpu_custom_call.1} parent=0
    _
  %s8 = ssub.s32 1, %s6
  %s9 = scalar_select 0, %s8, %s6
  %10 = sst [smem:[#allocation2]] %s4
  $region1: #{tpu_custom_call.1} parent=0
    #allocation3 [shape = 'u8[16384]{0}', space=vmem, size = 0x4000, scoped, tag = 'input window, operand 0, single buffered']
    #allocation4 [shape = 's32[1]{0}', space=sflag, size = 0x4, scoped, tag = 'scoped memory for tpu_custom_call.1']
    #allocation5 [shape = 's32[1]{0}', space=sflag, size = 0x4, scoped, tag = 'scoped memory for tpu_custom_call.1']
    #allocation6 [shape = 'u8[262144]{0}', space=vmem, size = 0x40000, scoped, tag = 'input window, operand 1, single buffered']
    #allocation7 [shape = 's32[1]{0}', space=sflag, size = 0x4, scoped, tag = 'scoped memory for tpu_custom_call.1']
    #allocation8 [shape = 'u8[8192]{0}', space=vmem, size = 0x2000, scoped, tag = 'input window, operand 3, single buffered']
    #allocation9 [shape = 'u8[4096]{0}', space=vmem, size = 0x1000, scoped, tag = 'output window, operand 0, single buffered']
    %11 = vsyncpa [#allocation4], 0
    %12 = vsyncpa [#allocation7], 0
    %13 = vsyncpa [#allocation5], 0
    // Predicated region
    $region2: #{tpu_custom_call.1} parent=1 // pred_check
      _
    $region3: #{tpu_custom_call.1} parent=1 // pred_check_branch
      %15 = sbr.rel (0) target = $region5
    $region4: #{tpu_custom_call.1} parent=1 // pred_region
      %s17 = ssub.s32 512, 512
      %18 = vsyncadd [#allocation4], %s17
      %s19 = sshll.u32 [#allocation3], 4
      %s20 = int_to_ptr.vmem [resolvable:$true] %s19
      %25 = dma.hbm_to_vmem [thread:$0]  %s0, 512, %s20, [#allocation4], 256, 256, 16
    $region5: #{tpu_custom_call.1} parent=1 // pred_fallthru
      _
    // Predicated region
    $region6: #{tpu_custom_call.1} parent=1 // pred_check
      _
    $region7: #{tpu_custom_call.1} parent=1 // pred_check_branch
      %27 = sbr.rel (0) target = $region9
    $region8: #{tpu_custom_call.1} parent=1 // pred_region
      %s29 = ssub.s32 8192, 8192
      %30 = vsyncadd [#allocation7], %s29
      %s31 = sshll.u32 [#allocation6], 4
      %s32 = int_to_ptr.vmem [resolvable:$true] %s31
      %37 = dma.hbm_to_vmem [thread:$0]  %s1, 8192, %s32, [#allocation7], 256, 256, 16
    $region9: #{tpu_custom_call.1} parent=1 // pred_fallthru
      _
    // Predicated region
    $region10: #{tpu_custom_call.1} parent=1 // pred_check
      _
    $region11: #{tpu_custom_call.1} parent=1 // pred_check_branch
      %39 = sbr.rel (0) target = $region13
    $region12: #{tpu_custom_call.1} parent=1 // pred_region
      _
    $region13: #{tpu_custom_call.1} parent=1 // pred_fallthru
      _
    // Predicated region
    $region14: #{tpu_custom_call.1} parent=1 // pred_check
      _
    $region15: #{tpu_custom_call.1} parent=1 // pred_check_branch
      %41 = sbr.rel (0) target = $region17
    $region16: #{tpu_custom_call.1} parent=1 // pred_region
      %s43 = ssub.s32 256, 256
      %44 = vsyncadd [#allocation7], %s43
      %s46 = sshll.u32 [#allocation8], 4
      %s47 = int_to_ptr.vmem [resolvable:$true] %s46
      %49 = dma.hbm_to_vmem [thread:$0]  %s3, 256, %s47, [#allocation7]
    $region17: #{tpu_custom_call.1} parent=1 // pred_fallthru
      _
    // Predicated region
    $region18: #{tpu_custom_call.1} parent=1 // pred_check
      _
    $region19: #{tpu_custom_call.1} parent=1 // pred_check_branch
      %51 = sbr.rel (0) target = $region21
    $region20: #{tpu_custom_call.1} parent=1 // pred_region
      _
    $region21: #{tpu_custom_call.1} parent=1 // pred_fallthru
      _
    // Predicated region
    $region22: #{tpu_custom_call.1} parent=1 // pred_check
      _
    $region23: #{tpu_custom_call.1} parent=1 // pred_check_branch
      %53 = sbr.rel (0) target = $region25
    $region24: #{tpu_custom_call.1} parent=1 // pred_region
      %54 = dma.done [#allocation4], 512
    $region25: #{tpu_custom_call.1} parent=1 // pred_fallthru
      _
    // Predicated region
    $region26: #{tpu_custom_call.1} parent=1 // pred_check
      _
    $region27: #{tpu_custom_call.1} parent=1 // pred_check_branch
      %56 = sbr.rel (0) target = $region29
    $region28: #{tpu_custom_call.1} parent=1 // pred_region
      %57 = dma.done [#allocation7], 8192
    $region29: #{tpu_custom_call.1} parent=1 // pred_fallthru
      _
    // Predicated region
    $region30: #{tpu_custom_call.1} parent=1 // pred_check
      _
    $region31: #{tpu_custom_call.1} parent=1 // pred_check_branch
      %59 = sbr.rel (0) target = $region33
    $region32: #{tpu_custom_call.1} parent=1 // pred_region
      %60 = dma.done [#allocation7], 256
    $region33: #{tpu_custom_call.1} parent=1 // pred_fallthru
      _
    %v62 = vld [vmem:[#allocation3] sm:$0xff]
    %v63 = vld [vmem:[#allocation3 + $0x8] sm:$0xff]
    %v64 = vld [vmem:[#allocation3 + $0x10] sm:$0xff]
    %v65 = vld [vmem:[#allocation3 + $0x18] sm:$0xff]
    %v66 = vpack.c.bf16 %v64, %v62
    %v67 = vpack.c.bf16 %v65, %v63
    %v68 = vld [vmem:[#allocation6] sm:$0xff]
    %v69 = vld [vmem:[#allocation6 + $0x8] sm:$0xff]
    %v70 = vld [vmem:[#allocation6 + $0x10] sm:$0xff]
    %v71 = vld [vmem:[#allocation6 + $0x18] sm:$0xff]
    %v72 = vld [vmem:[#allocation6 + $0x20] sm:$0xff]
    %v73 = vld [vmem:[#allocation6 + $0x28] sm:$0xff]
    %v74 = vld [vmem:[#allocation6 + $0x30] sm:$0xff]
    %v75 = vld [vmem:[#allocation6 + $0x38] sm:$0xff]
    %v76 = vld [vmem:[#allocation6 + $0x40] sm:$0xff]
    %v77 = vld [vmem:[#allocation6 + $0x48] sm:$0xff]
    %v78 = vld [vmem:[#allocation6 + $0x50] sm:$0xff]
    %v79 = vld [vmem:[#allocation6 + $0x58] sm:$0xff]
    %v80 = vld [vmem:[#allocation6 + $0x60] sm:$0xff]
    %v81 = vld [vmem:[#allocation6 + $0x68] sm:$0xff]
    %v82 = vld [vmem:[#allocation6 + $0x70] sm:$0xff]
    %v83 = vld [vmem:[#allocation6 + $0x78] sm:$0xff]
    %v84 = vld [vmem:[#allocation6 + $0x80] sm:$0xff]
    %v85 = vld [vmem:[#allocation6 + $0x88] sm:$0xff]
    %v86 = vld [vmem:[#allocation6 + $0x90] sm:$0xff]
    %v87 = vld [vmem:[#allocation6 + $0x98] sm:$0xff]
    %v88 = vld [vmem:[#allocation6 + $0xa0] sm:$0xff]
    %v89 = vld [vmem:[#allocation6 + $0xa8] sm:$0xff]
    %v90 = vld [vmem:[#allocation6 + $0xb0] sm:$0xff]
    %v91 = vld [vmem:[#allocation6 + $0xb8] sm:$0xff]
    %v92 = vld [vmem:[#allocation6 + $0xc0] sm:$0xff]
    %v93 = vld [vmem:[#allocation6 + $0xc8] sm:$0xff]
    %v94 = vld [vmem:[#allocation6 + $0xd0] sm:$0xff]
    %v95 = vld [vmem:[#allocation6 + $0xd8] sm:$0xff]
    %v96 = vld [vmem:[#allocation6 + $0xe0] sm:$0xff]
    %v97 = vld [vmem:[#allocation6 + $0xe8] sm:$0xff]
    %v98 = vld [vmem:[#allocation6 + $0xf0] sm:$0xff]
    %v99 = vld [vmem:[#allocation6 + $0xf8] sm:$0xff]
    %v100 = vld [vmem:[#allocation6 + $0x100] sm:$0xff]
    %v101 = vld [vmem:[#allocation6 + $0x108] sm:$0xff]
    %v102 = vld [vmem:[#allocation6 + $0x110] sm:$0xff]
    %v103 = vld [vmem:[#allocation6 + $0x118] sm:$0xff]
    %v104 = vld [vmem:[#allocation6 + $0x120] sm:$0xff]
    %v105 = vld [vmem:[#allocation6 + $0x128] sm:$0xff]
    %v106 = vld [vmem:[#allocation6 + $0x130] sm:$0xff]
    %v107 = vld [vmem:[#allocation6 + $0x138] sm:$0xff]
    %v108 = vld [vmem:[#allocation6 + $0x140] sm:$0xff]
    %v109 = vld [vmem:[#allocation6 + $0x148] sm:$0xff]
    %v110 = vld [vmem:[#allocation6 + $0x150] sm:$0xff]
    %v111 = vld [vmem:[#allocation6 + $0x158] sm:$0xff]
    %v112 = vld [vmem:[#allocation6 + $0x160] sm:$0xff]
    %v113 = vld [vmem:[#allocation6 + $0x168] sm:$0xff]
    %v114 = vld [vmem:[#allocation6 + $0x170] sm:$0xff]
    %v115 = vld [vmem:[#allocation6 + $0x178] sm:$0xff]
    %v116 = vld [vmem:[#allocation6 + $0x180] sm:$0xff]
    %v117 = vld [vmem:[#allocation6 + $0x188] sm:$0xff]
    %v118 = vld [vmem:[#allocation6 + $0x190] sm:$0xff]
    %v119 = vld [vmem:[#allocation6 + $0x198] sm:$0xff]
    %v120 = vld [vmem:[#allocation6 + $0x1a0] sm:$0xff]
    %v121 = vld [vmem:[#allocation6 + $0x1a8] sm:$0xff]
    %v122 = vld [vmem:[#allocation6 + $0x1b0] sm:$0xff]
    %v123 = vld [vmem:[#allocation6 + $0x1b8] sm:$0xff]
    %v124 = vld [vmem:[#allocation6 + $0x1c0] sm:$0xff]
    %v125 = vld [vmem:[#allocation6 + $0x1c8] sm:$0xff]
    %v126 = vld [vmem:[#allocation6 + $0x1d0] sm:$0xff]
    %v127 = vld [vmem:[#allocation6 + $0x1d8] sm:$0xff]
    %v128 = vld [vmem:[#allocation6 + $0x1e0] sm:$0xff]
    %v129 = vld [vmem:[#allocation6 + $0x1e8] sm:$0xff]
    %v130 = vld [vmem:[#allocation6 + $0x1f0] sm:$0xff]
    %v131 = vld [vmem:[#allocation6 + $0x1f8] sm:$0xff]
    %v132 = vld [vmem:[%s2] sm:$0xf]
    %v134 = vlaneseq
    %v135 = vshrl.u32 %v134, 7
    %v136 = vsub.s32 0, %v135
    %v137 = vrot.slane %v132, %v136
    %v138 = vlaneseq
    %v139 = vshrl.u32 %v138, 7
    %v140 = vsub.s32 1, %v139
    %v141 = vrot.slane %v132, %v140
    %v142 = vlaneseq
    %v143 = vshrl.u32 %v142, 7
    %v144 = vsub.s32 2, %v143
    %v145 = vrot.slane %v132, %v144
    %v146 = vlaneseq
    %v147 = vshrl.u32 %v146, 7
    %v148 = vsub.s32 3, %v147
    %v149 = vrot.slane %v132, %v148
    %v218 = vunpack.c.l.b16 %v68
    %v219 = vunpack.c.h.b16 %v68
    %v220 = vunpack.c.l.b16 %v69
    %v221 = vunpack.c.h.b16 %v69
    %v222 = vunpack.c.l.b16 %v70
    %v223 = vunpack.c.h.b16 %v70
    %v224 = vunpack.c.l.b16 %v71
    %v225 = vunpack.c.h.b16 %v71
    %v226 = vunpack.c.l.b16 %v72
    %v227 = vunpack.c.h.b16 %v72
    %v228 = vunpack.c.l.b16 %v73
    %v229 = vunpack.c.h.b16 %v73
    %v230 = vunpack.c.l.b16 %v74
    %v231 = vunpack.c.h.b16 %v74
    %v232 = vunpack.c.l.b16 %v75
    %v233 = vunpack.c.h.b16 %v75
    %v234 = vunpack.c.l.b16 %v76
    %v235 = vunpack.c.h.b16 %v76
    %v236 = vunpack.c.l.b16 %v77
    %v237 = vunpack.c.h.b16 %v77
    %v238 = vunpack.c.l.b16 %v78
    %v239 = vunpack.c.h.b16 %v78
    %v240 = vunpack.c.l.b16 %v79
    %v241 = vunpack.c.h.b16 %v79
    %v242 = vunpack.c.l.b16 %v80
    %v243 = vunpack.c.h.b16 %v80
    %v244 = vunpack.c.l.b16 %v81
    %v245 = vunpack.c.h.b16 %v81
    %v246 = vunpack.c.l.b16 %v82
    %v247 = vunpack.c.h.b16 %v82
    %v248 = vunpack.c.l.b16 %v83
    %v249 = vunpack.c.h.b16 %v83
    %v250 = vunpack.c.l.b16 %v84
    %v251 = vunpack.c.h.b16 %v84
    %v252 = vunpack.c.l.b16 %v85
    %v253 = vunpack.c.h.b16 %v85
    %v254 = vunpack.c.l.b16 %v86
    %v255 = vunpack.c.h.b16 %v86
    %v256 = vunpack.c.l.b16 %v87
    %v257 = vunpack.c.h.b16 %v87
    %v258 = vunpack.c.l.b16 %v88
    %v259 = vunpack.c.h.b16 %v88
    %v260 = vunpack.c.l.b16 %v89
    %v261 = vunpack.c.h.b16 %v89
    %v262 = vunpack.c.l.b16 %v90
    %v263 = vunpack.c.h.b16 %v90
    %v264 = vunpack.c.l.b16 %v91
    %v265 = vunpack.c.h.b16 %v91
    %v266 = vunpack.c.l.b16 %v92
    %v267 = vunpack.c.h.b16 %v92
    %v268 = vunpack.c.l.b16 %v93
    %v269 = vunpack.c.h.b16 %v93
    %v270 = vunpack.c.l.b16 %v94
    %v271 = vunpack.c.h.b16 %v94
    %v272 = vunpack.c.l.b16 %v95
    %v273 = vunpack.c.h.b16 %v95
    %v274 = vunpack.c.l.b16 %v96
    %v275 = vunpack.c.h.b16 %v96
    %v276 = vunpack.c.l.b16 %v97
    %v277 = vunpack.c.h.b16 %v97
    %v278 = vunpack.c.l.b16 %v98
    %v279 = vunpack.c.h.b16 %v98
    %v280 = vunpack.c.l.b16 %v99
    %v281 = vunpack.c.h.b16 %v99
    %v282 = vunpack.c.l.b16 %v100
    %v283 = vunpack.c.h.b16 %v100
    %v284 = vunpack.c.l.b16 %v101
    %v285 = vunpack.c.h.b16 %v101
    %v286 = vunpack.c.l.b16 %v102
    %v287 = vunpack.c.h.b16 %v102
    %v288 = vunpack.c.l.b16 %v103
    %v289 = vunpack.c.h.b16 %v103
    %v290 = vunpack.c.l.b16 %v104
    %v291 = vunpack.c.h.b16 %v104
    %v292 = vunpack.c.l.b16 %v105
    %v293 = vunpack.c.h.b16 %v105
    %v294 = vunpack.c.l.b16 %v106
    %v295 = vunpack.c.h.b16 %v106
    %v296 = vunpack.c.l.b16 %v107
    %v297 = vunpack.c.h.b16 %v107
    %v298 = vunpack.c.l.b16 %v108
    %v299 = vunpack.c.h.b16 %v108
    %v300 = vunpack.c.l.b16 %v109
    %v301 = vunpack.c.h.b16 %v109
    %v302 = vunpack.c.l.b16 %v110
    %v303 = vunpack.c.h.b16 %v110
    %v304 = vunpack.c.l.b16 %v111
    %v305 = vunpack.c.h.b16 %v111
    %v306 = vunpack.c.l.b16 %v112
    %v307 = vunpack.c.h.b16 %v112
    %v308 = vunpack.c.l.b16 %v113
    %v309 = vunpack.c.h.b16 %v113
    %v310 = vunpack.c.l.b16 %v114
    %v311 = vunpack.c.h.b16 %v114
    %v312 = vunpack.c.l.b16 %v115
    %v313 = vunpack.c.h.b16 %v115
    %v314 = vunpack.c.l.b16 %v116
    %v315 = vunpack.c.h.b16 %v116
    %v316 = vunpack.c.l.b16 %v117
    %v317 = vunpack.c.h.b16 %v117
    %v318 = vunpack.c.l.b16 %v118
    %v319 = vunpack.c.h.b16 %v118
    %v320 = vunpack.c.l.b16 %v119
    %v321 = vunpack.c.h.b16 %v119
    %v322 = vunpack.c.l.b16 %v120
    %v323 = vunpack.c.h.b16 %v120
    %v324 = vunpack.c.l.b16 %v121
    %v325 = vunpack.c.h.b16 %v121
    %v326 = vunpack.c.l.b16 %v122
    %v327 = vunpack.c.h.b16 %v122
    %v328 = vunpack.c.l.b16 %v123
    %v329 = vunpack.c.h.b16 %v123
    %v330 = vunpack.c.l.b16 %v124
    %v331 = vunpack.c.h.b16 %v124
    %v332 = vunpack.c.l.b16 %v125
    %v333 = vunpack.c.h.b16 %v125
    %v334 = vunpack.c.l.b16 %v126
    %v335 = vunpack.c.h.b16 %v126
    %v336 = vunpack.c.l.b16 %v127
    %v337 = vunpack.c.h.b16 %v127
    %v338 = vunpack.c.l.b16 %v128
    %v339 = vunpack.c.h.b16 %v128
    %v340 = vunpack.c.l.b16 %v129
    %v341 = vunpack.c.h.b16 %v129
    %v342 = vunpack.c.l.b16 %v130
    %v343 = vunpack.c.h.b16 %v130
    %v344 = vunpack.c.l.b16 %v131
    %v345 = vunpack.c.h.b16 %v131
    %v346 = vpack.c.b16 %v222, %v218
    %v347 = vpack.c.b16 %v223, %v219
    %v348 = vpack.c.b16 %v224, %v220
    %v349 = vpack.c.b16 %v225, %v221
    %v350 = vpack.c.b16 %v230, %v226
    %v351 = vpack.c.b16 %v231, %v227
    %v352 = vpack.c.b16 %v232, %v228
    %v353 = vpack.c.b16 %v233, %v229
    %v354 = vpack.c.b16 %v238, %v234
    %v355 = vpack.c.b16 %v239, %v235
    %v356 = vpack.c.b16 %v240, %v236
    %v357 = vpack.c.b16 %v241, %v237
    %v358 = vpack.c.b16 %v246, %v242
    %v359 = vpack.c.b16 %v247, %v243
    %v360 = vpack.c.b16 %v248, %v244
    %v361 = vpack.c.b16 %v249, %v245
    %v362 = vpack.c.b16 %v254, %v250
    %v363 = vpack.c.b16 %v255, %v251
    %v364 = vpack.c.b16 %v256, %v252
    %v365 = vpack.c.b16 %v257, %v253
    %v366 = vpack.c.b16 %v262, %v258
    %v367 = vpack.c.b16 %v263, %v259
    %v368 = vpack.c.b16 %v264, %v260
    %v369 = vpack.c.b16 %v265, %v261
    %v370 = vpack.c.b16 %v270, %v266
    %v371 = vpack.c.b16 %v271, %v267
    %v372 = vpack.c.b16 %v272, %v268
    %v373 = vpack.c.b16 %v273, %v269
    %v374 = vpack.c.b16 %v278, %v274
    %v375 = vpack.c.b16 %v279, %v275
    %v376 = vpack.c.b16 %v280, %v276
    %v377 = vpack.c.b16 %v281, %v277
    %v378 = vpack.c.b16 %v286, %v282
    %v379 = vpack.c.b16 %v287, %v283
    %v380 = vpack.c.b16 %v288, %v284
    %v381 = vpack.c.b16 %v289, %v285
    %v382 = vpack.c.b16 %v294, %v290
    %v383 = vpack.c.b16 %v295, %v291
    %v384 = vpack.c.b16 %v296, %v292
    %v385 = vpack.c.b16 %v297, %v293
    %v386 = vpack.c.b16 %v302, %v298
    %v387 = vpack.c.b16 %v303, %v299
    %v388 = vpack.c.b16 %v304, %v300
    %v389 = vpack.c.b16 %v305, %v301
    %v390 = vpack.c.b16 %v310, %v306
    %v391 = vpack.c.b16 %v311, %v307
    %v392 = vpack.c.b16 %v312, %v308
    %v393 = vpack.c.b16 %v313, %v309
    %v394 = vpack.c.b16 %v318, %v314
    %v395 = vpack.c.b16 %v319, %v315
    %v396 = vpack.c.b16 %v320, %v316
    %v397 = vpack.c.b16 %v321, %v317
    %v398 = vpack.c.b16 %v326, %v322
    %v399 = vpack.c.b16 %v327, %v323
    %v400 = vpack.c.b16 %v328, %v324
    %v401 = vpack.c.b16 %v329, %v325
    %v402 = vpack.c.b16 %v334, %v330
    %v403 = vpack.c.b16 %v335, %v331
    %v404 = vpack.c.b16 %v336, %v332
    %v405 = vpack.c.b16 %v337, %v333
    %v406 = vpack.c.b16 %v342, %v338
    %v407 = vpack.c.b16 %v343, %v339
    %v408 = vpack.c.b16 %v344, %v340
    %v409 = vpack.c.b16 %v345, %v341
    %474 = vmatprep.subr.bf16.mxu0 %v347
    %475 = vmatpush1.bf16.msra.mxu0 %v346
    %476 = vmatprep.subr.bf16.mxu0 %v351
    %477 = vmatpush1.bf16.msra.mxu0 %v350
    %478 = vmatprep.subr.bf16.mxu0 %v355
    %479 = vmatpush1.bf16.msra.mxu0 %v354
    %480 = vmatprep.subr.bf16.mxu0 %v359
    %481 = vmatpush1.bf16.msra.mxu0 %v358
    %482 = vmatprep.subr.bf16.mxu0 %v363
    %483 = vmatpush1.bf16.msra.mxu0 %v362
    %484 = vmatprep.subr.bf16.mxu0 %v367
    %485 = vmatpush1.bf16.msra.mxu0 %v366
    %486 = vmatprep.subr.bf16.mxu0 %v371
    %487 = vmatpush1.bf16.msra.mxu0 %v370
    %488 = vmatprep.subr.bf16.mxu0 %v375
    %489 = vmatpush1.bf16.msra.mxu0 %v374
    %490 = vmatprep.subr.bf16.mxu0 %v379
    %491 = vmatpush1.bf16.msra.mxu0 %v378
    %492 = vmatprep.subr.bf16.mxu0 %v383
    %493 = vmatpush1.bf16.msra.mxu0 %v382
    %494 = vmatprep.subr.bf16.mxu0 %v387
    %495 = vmatpush1.bf16.msra.mxu0 %v386
    %496 = vmatprep.subr.bf16.mxu0 %v391
    %497 = vmatpush1.bf16.msra.mxu0 %v390
    %498 = vmatprep.subr.bf16.mxu0 %v395
    %499 = vmatpush1.bf16.msra.mxu0 %v394
    %500 = vmatprep.subr.bf16.mxu0 %v399
    %501 = vmatpush1.bf16.msra.mxu0 %v398
    %502 = vmatprep.subr.bf16.mxu0 %v403
    %503 = vmatpush1.bf16.msra.mxu0 %v402
    %504 = vmatprep.subr.bf16.mxu0 %v407
    %505 = vmatpush1.bf16.msra.mxu0 %v406
    %506 = vmatprep.mubr.bf16.mxu0 %v67
    %507 = vmatmul.mubr.bf16.gmra.mrb[0].mxu0 %v66
    %v508 = vpop.f32.mrb[0].mxu0
    %v509 = vadd.f32 %v137, %v508
    %v510 = vpop.f32.mrb[0].mxu0
    %v511 = vadd.f32 %v141, %v510
    %v512 = vpop.f32.mrb[0].mxu0
    %v513 = vadd.f32 %v137, %v512
    %v514 = vpop.f32.mrb[0].mxu0
    %v515 = vadd.f32 %v141, %v514
    %516 = vdwg.mxu0
    %517 = vmatprep.subr.bf16.mxu0 %v349
    %518 = vmatpush1.bf16.msra.mxu0 %v348
    %519 = vmatprep.subr.bf16.mxu0 %v353
    %520 = vmatpush1.bf16.msra.mxu0 %v352
    %521 = vmatprep.subr.bf16.mxu0 %v357
    %522 = vmatpush1.bf16.msra.mxu0 %v356
    %523 = vmatprep.subr.bf16.mxu0 %v361
    %524 = vmatpush1.bf16.msra.mxu0 %v360
    %525 = vmatprep.subr.bf16.mxu0 %v365
    %526 = vmatpush1.bf16.msra.mxu0 %v364
    %527 = vmatprep.subr.bf16.mxu0 %v369
    %528 = vmatpush1.bf16.msra.mxu0 %v368
    %529 = vmatprep.subr.bf16.mxu0 %v373
    %530 = vmatpush1.bf16.msra.mxu0 %v372
    %531 = vmatprep.subr.bf16.mxu0 %v377
    %532 = vmatpush1.bf16.msra.mxu0 %v376
    %533 = vmatprep.subr.bf16.mxu0 %v381
    %534 = vmatpush1.bf16.msra.mxu0 %v380
    %535 = vmatprep.subr.bf16.mxu0 %v385
    %536 = vmatpush1.bf16.msra.mxu0 %v384
    %537 = vmatprep.subr.bf16.mxu0 %v389
    %538 = vmatpush1.bf16.msra.mxu0 %v388
    %539 = vmatprep.subr.bf16.mxu0 %v393
    %540 = vmatpush1.bf16.msra.mxu0 %v392
    %541 = vmatprep.subr.bf16.mxu0 %v397
    %542 = vmatpush1.bf16.msra.mxu0 %v396
    %543 = vmatprep.subr.bf16.mxu0 %v401
    %544 = vmatpush1.bf16.msra.mxu0 %v400
    %545 = vmatprep.subr.bf16.mxu0 %v405
    %546 = vmatpush1.bf16.msra.mxu0 %v404
    %547 = vmatprep.subr.bf16.mxu0 %v409
    %548 = vmatpush1.bf16.msra.mxu0 %v408
    %549 = vmatprep.mubr.bf16.mxu0 %v67
    %550 = vmatmul.mubr.bf16.gmra.mrb[0].mxu0 %v66
    %v551 = vpop.f32.mrb[0].mxu0
    %v552 = vadd.f32 %v145, %v551
    %v553 = vpop.f32.mrb[0].mxu0
    %v554 = vadd.f32 %v149, %v553
    %v555 = vpop.f32.mrb[0].mxu0
    %v556 = vadd.f32 %v145, %v555
    %v557 = vpop.f32.mrb[0].mxu0
    %v558 = vadd.f32 %v149, %v557
    %559 = vdwg.mxu0
    %v560 = vmax.f32 %v509, 0.0
    %v561 = vmax.f32 %v511, 0.0
    %v562 = vmax.f32 %v552, 0.0
    %v563 = vmax.f32 %v554, 0.0
    %v564 = vmax.f32 %v513, 0.0
    %v565 = vmax.f32 %v515, 0.0
    %v566 = vmax.f32 %v556, 0.0
    %v567 = vmax.f32 %v558, 0.0
    %v568 = vpack.c.bf16 %v564, %v560
    %v569 = vpack.c.bf16 %v565, %v561
    %v570 = vpack.c.bf16 %v566, %v562
    %v571 = vpack.c.bf16 %v567, %v563
    %v572 = vld [vmem:[#allocation8] sm:$0xff]
    %v573 = vld [vmem:[#allocation8 + $0x8] sm:$0xff]
    %s574 = sld [smem:[#allocation2]]
    %v575 = vstv %s574
    %v578 = vunpack.c.l.b16 %v572
    %v579 = vunpack.c.h.b16 %v572
    %v580 = vunpack.c.l.b16 %v573
    %v581 = vunpack.c.h.b16 %v573
    %v582 = vpack.c.b16 %v578, %v578
    %v583 = vpack.c.b16 %v579, %v579
    %v584 = vpack.c.b16 %v580, %v580
    %v585 = vpack.c.b16 %v581, %v581
    %590 = vmatprep.subr.bf16.mxu0 %v569
    %591 = vmatpush1.bf16.xpose.msra.mxu0 %v568
    %592 = vmatprep.subr.bf16.mxu0 0
    %593 = vmatpush1.bf16.xpose.msra.mxu0 0
    %594 = vmatprep.subr.bf16.mxu0 0
    %595 = vmatpush1.bf16.xpose.msra.mxu0 0
    %596 = vmatprep.subr.bf16.mxu0 0
    %597 = vmatpush1.bf16.xpose.msra.mxu0 0
    %598 = vmatprep.subr.bf16.mxu0 0
    %599 = vmatpush1.bf16.xpose.msra.mxu0 0
    %600 = vmatprep.subr.bf16.mxu0 0
    %601 = vmatpush1.bf16.xpose.msra.mxu0 0
    %602 = vmatprep.subr.bf16.mxu0 0
    %603 = vmatpush1.bf16.xpose.msra.mxu0 0
    %604 = vmatprep.subr.bf16.mxu0 0
    %605 = vmatpush1.bf16.xpose.msra.mxu0 0
    %606 = vmatprep.subr.bf16.mxu0 0
    %607 = vmatpush1.bf16.xpose.msra.mxu0 0
    %608 = vmatprep.subr.bf16.mxu0 0
    %609 = vmatpush1.bf16.xpose.msra.mxu0 0
    %610 = vmatprep.subr.bf16.mxu0 0
    %611 = vmatpush1.bf16.xpose.msra.mxu0 0
    %612 = vmatprep.subr.bf16.mxu0 0
    %613 = vmatpush1.bf16.xpose.msra.mxu0 0
    %614 = vmatprep.subr.bf16.mxu0 0
    %615 = vmatpush1.bf16.xpose.msra.mxu0 0
    %616 = vmatprep.subr.bf16.mxu0 0
    %617 = vmatpush1.bf16.xpose.msra.mxu0 0
    %618 = vmatprep.subr.bf16.mxu0 0
    %619 = vmatpush1.bf16.xpose.msra.mxu0 0
    %620 = vmatprep.subr.bf16.mxu0 0
    %621 = vmatpush1.bf16.xpose.msra.mxu0 0
    %622 = vmatprep.mubr.bf16.mxu0 %v583
    %623 = vmatmul.mubr.bf16.gmra.mrb[0].mxu0 %v582
    %v624 = vpop.f32.mrb[0].mxu0
    %v625 = vadd.f32 %v575, %v624
    %v626 = vpop.f32.mrb[0].mxu0
    %v627 = vpop.f32.mrb[0].mxu0
    %v628 = vpop.f32.mrb[0].mxu0
    %629 = vdwg.mxu0
    %630 = vmatprep.subr.bf16.mxu0 %v571
    %631 = vmatpush1.bf16.xpose.msra.mxu0 %v570
    %632 = vmatprep.subr.bf16.mxu0 0
    %633 = vmatpush1.bf16.xpose.msra.mxu0 0
    %634 = vmatprep.subr.bf16.mxu0 0
    %635 = vmatpush1.bf16.xpose.msra.mxu0 0
    %636 = vmatprep.subr.bf16.mxu0 0
    %637 = vmatpush1.bf16.xpose.msra.mxu0 0
    %638 = vmatprep.subr.bf16.mxu0 0
    %639 = vmatpush1.bf16.xpose.msra.mxu0 0
    %640 = vmatprep.subr.bf16.mxu0 0
    %641 = vmatpush1.bf16.xpose.msra.mxu0 0
    %642 = vmatprep.subr.bf16.mxu0 0
    %643 = vmatpush1.bf16.xpose.msra.mxu0 0
    %644 = vmatprep.subr.bf16.mxu0 0
    %645 = vmatpush1.bf16.xpose.msra.mxu0 0
    %646 = vmatprep.subr.bf16.mxu0 0
    %647 = vmatpush1.bf16.xpose.msra.mxu0 0
    %648 = vmatprep.subr.bf16.mxu0 0
    %649 = vmatpush1.bf16.xpose.msra.mxu0 0
    %650 = vmatprep.subr.bf16.mxu0 0
    %651 = vmatpush1.bf16.xpose.msra.mxu0 0
    %652 = vmatprep.subr.bf16.mxu0 0
    %653 = vmatpush1.bf16.xpose.msra.mxu0 0
    %654 = vmatprep.subr.bf16.mxu0 0
    %655 = vmatpush1.bf16.xpose.msra.mxu0 0
    %656 = vmatprep.subr.bf16.mxu0 0
    %657 = vmatpush1.bf16.xpose.msra.mxu0 0
    %658 = vmatprep.subr.bf16.mxu0 0
    %659 = vmatpush1.bf16.xpose.msra.mxu0 0
    %660 = vmatprep.subr.bf16.mxu0 0
    %661 = vmatpush1.bf16.xpose.msra.mxu0 0
    %662 = vmatprep.mubr.bf16.mxu0 %v585
    %663 = vmatmul.mubr.bf16.gmra.mrb[0].mxu0 %v584
    %v664 = vpop.f32.mrb[0].mxu0
    %v665 = vadd.f32 %v625, %v664
    %v666 = vpop.f32.mrb[0].mxu0
    %v667 = vpop.f32.mrb[0].mxu0
    %v668 = vpop.f32.mrb[0].mxu0
    %669 = vdwg.mxu0
    %vm670 = vcmask 130048
    %671 = vst.msk [vmem:[#allocation9] sm:$0xff] %vm670, %v665
    // Predicated region
    $region34: #{tpu_custom_call.1} parent=1 // pred_check
      _
    $region35: #{tpu_custom_call.1} parent=1 // pred_check_branch
      %673 = sbr.rel (0) target = $region37
    $region36: #{tpu_custom_call.1} parent=1 // pred_region
      %s675 = ssub.s32 128, 128
      %676 = vsyncadd [#allocation5], %s675
      %s678 = sshll.u32 [#allocation9], 4
      %s679 = int_to_ptr.vmem [resolvable:$true] %s678
      %681 = dma.vmem_to_hbm [thread:$0]  %s679, 128, %s5, [#allocation5]
    $region37: #{tpu_custom_call.1} parent=1 // pred_fallthru
      _
    // Predicated region
    $region38: #{tpu_custom_call.1} parent=1 // pred_check
      _
    $region39: #{tpu_custom_call.1} parent=1 // pred_check_branch
      %683 = sbr.rel (0) target = $region41
    $region40: #{tpu_custom_call.1} parent=1 // pred_region
      %684 = dma.done [#allocation5], 128
    $region41: #{tpu_custom_call.1} parent=1 // pred_fallthru
      _
    %685 = vsyncpa [#allocation4], 1
    %686 = vsyncpa [#allocation7], 1
    %687 = vsyncpa [#allocation5], 1

</llo_original>
